<compile_context>
chip_gen: v6e
topology: v6e:2x2x1
jax: 0.10.0
libtpu: 0.0.40
codegen_flags: <defaults>
</compile_context>

<pallas_src>
import jax
import jax.numpy as jnp
from jax.experimental import pallas as pl
from jax.experimental.pallas import tpu as pltpu


def _norm_kernel(scale_ref, bias_ref, img_ref, out_ref):
    # scale_ref / bias_ref: (padded_rows, 1) float32, resident across the grid.
    # img_ref / out_ref:    (block_rows, block_cols) tiles of the 2D slab.
    block_rows = img_ref.shape[0]
    r0 = pl.multiple_of(pl.program_id(0) * block_rows, block_rows)
    scale = scale_ref[pl.ds(r0, block_rows), :]
    bias = bias_ref[pl.ds(r0, block_rows), :]
    x = img_ref[...].astype(jnp.float32)              # fused int->float cast
    out_ref[...] = (x * scale + bias).astype(out_ref.dtype)


def _vmem_capacity_bytes():
    try:
        cap = getattr(pltpu.get_tpu_info(), "vmem_capacity_bytes", None)
        if cap:
            return int(cap)
    except Exception:
        pass
    return 64 * 1024 * 1024  # conservative default (v7x per-TensorCore VMEM)


def _choose_tiling(rows, cols, in_itemsize, out_itemsize):
    cap = _vmem_capacity_bytes()
    if cap >= 96 * 1024 * 1024:            # v5e / v6e: 128 MiB physical VMEM
        tile_budget = 8 * 1024 * 1024      # per image tile (larger of in/out)
        vmem_limit = 64 * 1024 * 1024      # ~4x tile double-buffered + slack
    else:                                  # v7x: 64 MiB VMEM per TensorCore
        tile_budget = 6 * 1024 * 1024
        vmem_limit = 48 * 1024 * 1024

    itemsize = max(in_itemsize, out_itemsize)
    # Sublane granularity from the narrowest dtype touched (f32:8, bf16:16, u8:32).
    sublane = 32 // min(in_itemsize, out_itemsize)

    # Column tiling: full H*W plane if one sublane-group of rows fits the
    # budget, otherwise a lane-dense multiple of 128 columns.
    if sublane * cols * itemsize <= tile_budget or cols <= 128:
        block_cols = cols
    else:
        block_cols = (tile_budget // (sublane * itemsize) // 128) * 128
        block_cols = max(128, min(block_cols, cols))
        block_cols = (block_cols // 128) * 128

    # Row tiling: biggest sublane multiple fitting the budget.
    max_rows = tile_budget // (block_cols * itemsize)
    if max_rows >= rows:
        block_rows = rows
    else:
        block_rows = max(sublane, (max_rows // sublane) * sublane)
        # Prefer a block that divides rows evenly (no ragged / masked tail),
        # as long as it costs at most a 2x smaller block.
        cand = block_rows
        while cand >= sublane and rows % cand:
            cand -= sublane
        if cand >= sublane and 2 * cand >= block_rows:
            block_rows = cand

    n_row_blocks = pl.cdiv(rows, block_rows)
    n_col_blocks = pl.cdiv(cols, block_cols)

    # Keep >= 2 parallel grid steps when possible so v7x's two TensorCores
    # both get work (dimension_semantics shards the parallel grid axes).
    if n_row_blocks * n_col_blocks == 1 and rows >= 2 * sublane:
        half = (rows + 1) // 2
        block_rows = min(rows, ((half + sublane - 1) // sublane) * sublane)
        n_row_blocks = pl.cdiv(rows, block_rows)

    return block_rows, block_cols, n_row_blocks, n_col_blocks, vmem_limit


def normalization(img, mean, std):
    """(img - mean[:, None, None]) / std[:, None, None] for an NCHW tensor."""
    N, C, H, W = img.shape

    # PyTorch promotes: torch.tensor(mean) is float32, so uint8 / low-precision
    # images come out float32.  Mirror that, but do the cast inside the kernel.
    out_dtype = jnp.promote_types(img.dtype, jnp.float32)

    mean = jnp.asarray(mean, dtype=jnp.float32).reshape(-1)
    std = jnp.asarray(std, dtype=jnp.float32).reshape(-1)
    assert mean.shape == (C,) and std.shape == (C,)

    # Fold the divide into a float32 scale/bias FMA (C elements, ~free).
    scale = 1.0 / std
    bias = -mean * scale

    rows, cols = N * C, H * W
    x2d = img.reshape(rows, cols)

    in_itemsize = jnp.dtype(img.dtype).itemsize
    out_itemsize = jnp.dtype(out_dtype).itemsize
    block_rows, block_cols, n_row_blocks, n_col_blocks, vmem_limit = _choose_tiling(
        rows, cols, in_itemsize, out_itemsize)

    # Per-row (per (n, c)) scale/bias columns, padded so the kernel's dynamic
    # row slice is always in bounds, even for a ragged last row block.
    padded_rows = n_row_blocks * block_rows
    scale_rows = jnp.tile(scale, N).reshape(rows, 1)
    bias_rows = jnp.tile(bias, N).reshape(rows, 1)
    if padded_rows != rows:
        pad = ((0, padded_rows - rows), (0, 0))
        scale_rows = jnp.pad(scale_rows, pad, constant_values=1.0)
        bias_rows = jnp.pad(bias_rows, pad)

    # TODO(synk): if profiling still shows exposed DMA on v7x (VMEM-capped
    # tiles), try pipeline_mode=pl.Buffered(3) on the image in/out specs.
    out2d = pl.pallas_call(
        _norm_kernel,
        out_shape=jax.ShapeDtypeStruct((rows, cols), out_dtype),
        grid=(n_row_blocks, n_col_blocks),
        in_specs=[
            pl.BlockSpec((padded_rows, 1), lambda i, j: (0, 0)),   # resident scale
            pl.BlockSpec((padded_rows, 1), lambda i, j: (0, 0)),   # resident bias
            pl.BlockSpec((block_rows, block_cols), lambda i, j: (i, j)),
        ],
        out_specs=pl.BlockSpec((block_rows, block_cols), lambda i, j: (i, j)),
        compiler_params=pltpu.CompilerParams(
            dimension_semantics=("parallel", "parallel"),
            vmem_limit_bytes=vmem_limit,
        ),
    )(scale_rows, bias_rows, x2d)

    return out2d.reshape(N, C, H, W)


if __name__ == "__main__":
    key = jax.random.PRNGKey(0)

    # --- float32 path ---
    N, C, H, W = 2, 4, 16, 16
    img = jax.random.uniform(key, (N, C, H, W), dtype=jnp.float32)
    mean = jnp.array([0.485, 0.456, 0.406, 0.5], dtype=jnp.float32)
    std = jnp.array([0.229, 0.224, 0.225, 0.25], dtype=jnp.float32)

    out = jax.block_until_ready(normalization(img, mean, std))
    ref = (img - mean[None, :, None, None]) / std[None, :, None, None]
    assert out.shape == img.shape and out.dtype == img.dtype
    assert jnp.allclose(out, ref, rtol=1e-5, atol=1e-6)

    # --- fused uint8 -> float32 path (common torchvision input) ---
    img_u8 = jax.random.randint(jax.random.PRNGKey(0), (8, 4, 16, 16), 0, 256).astype(jnp.uint8)
    mean_u8 = jnp.array([125.3, 122.9, 113.8, 128.0], dtype=jnp.float32)
    std_u8 = jnp.array([63.0, 62.1, 66.7, 64.0], dtype=jnp.float32)

    out_u8 = jax.block_until_ready(normalization(img_u8, mean_u8, std_u8))
    ref_u8 = (img_u8.astype(jnp.float32) - mean_u8[None, :, None, None]) / std_u8[None, :, None, None]
    assert out_u8.shape == img_u8.shape and out_u8.dtype == jnp.float32
    assert jnp.allclose(out_u8, ref_u8, rtol=1e-5, atol=1e-4)

    print("KERNEL_OK")
</pallas_src>

<mosaic_0001>
module attributes {stable_mosaic.version = 11 : i64} {
  func.func @_norm_kernel(%arg0: i32, %arg1: i32, %arg2: memref<8x1xf32, #tpu.memory_space<vmem>>, %arg3: memref<8x1xf32, #tpu.memory_space<vmem>>, %arg4: memref<8x256xf32, #tpu.memory_space<vmem>>, %arg5: memref<8x256xf32, #tpu.memory_space<vmem>>) attributes {dimension_semantics = [#tpu.dimension_semantics<parallel>, #tpu.dimension_semantics<parallel>], iteration_bounds = array<i64: 1, 1>, scalar_prefetch = 0 : i64, scratch_operands = 0 : i64, tpu.core_type = #tpu.core_type<tc>, window_params = [{pipeline_mode = #tpu.pipeline_mode<synchronous>, transform_indices = @transform_0, window_bounds = array<i64: 8, 1>}, {pipeline_mode = #tpu.pipeline_mode<synchronous>, transform_indices = @transform_1, window_bounds = array<i64: 8, 1>}, {transform_indices = @transform_2, window_bounds = array<i64: 8, 256>}, {transform_indices = @transform_3, window_bounds = array<i64: 8, 256>}]} {
    %c8_i32 = arith.constant 8 : i32
    %0 = arith.muli %arg0, %c8_i32 : i32
    %1 = tpu.assume_multiple %0, 8 : i32
    %2 = arith.index_cast %1 : i32 to index
    %c0 = arith.constant 0 : index
    %3 = vector.load %arg2[%2, %c0] : memref<8x1xf32, #tpu.memory_space<vmem>>, vector<8x1xf32>
    %4 = arith.index_cast %1 : i32 to index
    %c0_0 = arith.constant 0 : index
    %5 = vector.load %arg3[%4, %c0_0] : memref<8x1xf32, #tpu.memory_space<vmem>>, vector<8x1xf32>
    %c0_1 = arith.constant 0 : index
    %c0_2 = arith.constant 0 : index
    %6 = vector.load %arg4[%c0_1, %c0_2] : memref<8x256xf32, #tpu.memory_space<vmem>>, vector<8x256xf32>
    %7 = vector.broadcast %3 : vector<8x1xf32> to vector<8x256xf32>
    %8 = arith.mulf %6, %7 : vector<8x256xf32>
    %9 = vector.broadcast %5 : vector<8x1xf32> to vector<8x256xf32>
    %10 = arith.addf %8, %9 : vector<8x256xf32>
    %c0_3 = arith.constant 0 : index
    %c0_4 = arith.constant 0 : index
    %11 = vector.load %arg5[%c0_3, %c0_4] : memref<8x256xf32, #tpu.memory_space<vmem>>, vector<8x256xf32>
    tpu.vector_store %arg5[%c0_3, %c0_4], %10 {strides = array<i32>} : memref<8x256xf32, #tpu.memory_space<vmem>>, vector<8x256xf32>,
    return
  }
  func.func @transform_0(%arg0: i32, %arg1: i32) -> (i32, i32) {
    %c0_i32 = arith.constant 0 : i32
    %c0_i32_0 = arith.constant 0 : i32
    %c0_i32_1 = arith.constant 0 : i32
    return %c0_i32, %c0_i32_0 : i32, i32
  }
  func.func @transform_1(%arg0: i32, %arg1: i32) -> (i32, i32) {
    %c0_i32 = arith.constant 0 : i32
    %c0_i32_0 = arith.constant 0 : i32
    %c0_i32_1 = arith.constant 0 : i32
    return %c0_i32, %c0_i32_0 : i32, i32
  }
  func.func @transform_2(%arg0: i32, %arg1: i32) -> (i32, i32) {
    %c0_i32 = arith.constant 0 : i32
    return %arg0, %arg1 : i32, i32
  }
  func.func @transform_3(%arg0: i32, %arg1: i32) -> (i32, i32) {
    %c0_i32 = arith.constant 0 : i32
    return %arg0, %arg1 : i32, i32
  }
}

</mosaic_0001>

<llo_original>
// kernel: tpu_custom_call.1
$region0: #{tpu_custom_call.1}
  #allocation0 [shape = 'u32[]', space=smem, size = 0x4, offset = 0x4, fixed_abs, tag = 'smem constant byte address 0x4 - core index']
  #allocation1 [shape = 'u32[144,128]{1,0:T(1,128)}', space=vmem, size = 0x12000, scoped, tag = 'internal scratch']
  %s0 = inlined_call_operand.vmem [shape: f32[8,1], index: 0, kind: input, shape index: {}]
  %s1 = inlined_call_operand.vmem [shape: f32[8,1], index: 1, kind: input, shape index: {}]
  %s2 = inlined_call_operand.vmem [shape: f32[8,256], index: 2, kind: input, shape index: {}]
  %s3 = inlined_call_operand.hbm [shape: f32[8,256], index: 3, kind: output, shape index: {}]
  %s4 = sld [smem:[#allocation0]]
  $region22: #{tpu_custom_call.1} parent=0
    _
  %s6 = ssub.s32 1, %s4
  %s7 = scalar_select 0, %s6, %s4
  $region1: #{tpu_custom_call.1} parent=0
    #allocation2 [shape = 'u8[8192]{0}', space=vmem, size = 0x2000, scoped, tag = 'output window, operand 0, single buffered']
    #allocation3 [shape = 's32[1]{0}', space=sflag, size = 0x4, scoped, tag = 'scoped memory for tpu_custom_call.1']
    %8 = vsyncpa [#allocation3], 0
    // Predicated region
    $region2: #{tpu_custom_call.1} parent=1 // pred_check
      _
    $region3: #{tpu_custom_call.1} parent=1 // pred_check_branch
      %10 = sbr.rel (0) target = $region5
    $region4: #{tpu_custom_call.1} parent=1 // pred_region
      _
    $region5: #{tpu_custom_call.1} parent=1 // pred_fallthru
      _
    // Predicated region
    $region6: #{tpu_custom_call.1} parent=1 // pred_check
      _
    $region7: #{tpu_custom_call.1} parent=1 // pred_check_branch
      %12 = sbr.rel (0) target = $region9
    $region8: #{tpu_custom_call.1} parent=1 // pred_region
      _
    $region9: #{tpu_custom_call.1} parent=1 // pred_fallthru
      _
    // Predicated region
    $region10: #{tpu_custom_call.1} parent=1 // pred_check
      _
    $region11: #{tpu_custom_call.1} parent=1 // pred_check_branch
      %14 = sbr.rel (0) target = $region13
    $region12: #{tpu_custom_call.1} parent=1 // pred_region
      _
    $region13: #{tpu_custom_call.1} parent=1 // pred_fallthru
      _
    %s15 = smul.u32 0, 8
    %s16 = scalar_lea.vmem %s0, %s15
    %v17 = vld [vmem:[%s16] sm:$0xff]
    %s18 = scalar_lea.vmem %s1, %s15
    %v19 = vld [vmem:[%s18] sm:$0xff]
    %v20 = vld [vmem:[%s2] sm:$0xff]
    %v21 = vld [vmem:[%s2 + $0x8] sm:$0xff]
    %23 = vset.pattern.permute.xlu0 0
    %24 = vperm.xlu0 %23, %v17
    %v25 = vpop.permute.xlu0 %24
    %v27 = vmul.f32 %v20, %v25
    %v28 = vmul.f32 %v21, %v25
    %30 = vset.pattern.permute.xlu0 0
    %31 = vperm.xlu0 %30, %v19
    %v32 = vpop.permute.xlu0 %31
    %v34 = vadd.f32 %v27, %v32
    %v35 = vadd.f32 %v28, %v32
    %36 = vst [vmem:[#allocation2] sm:$0xff] %v34
    %37 = vst [vmem:[#allocation2 + $0x8] sm:$0xff] %v35
    // Predicated region
    $region14: #{tpu_custom_call.1} parent=1 // pred_check
      _
    $region15: #{tpu_custom_call.1} parent=1 // pred_check_branch
      %39 = sbr.rel (0) target = $region17
    $region16: #{tpu_custom_call.1} parent=1 // pred_region
      %s41 = ssub.s32 256, 256
      %42 = vsyncadd [#allocation3], %s41
      %s44 = sshll.u32 [#allocation2], 4
      %s45 = int_to_ptr.vmem [resolvable:$true] %s44
      %47 = dma.vmem_to_hbm [thread:$0]  %s45, 256, %s3, [#allocation3]
    $region17: #{tpu_custom_call.1} parent=1 // pred_fallthru
      _
    // Predicated region
    $region18: #{tpu_custom_call.1} parent=1 // pred_check
      _
    $region19: #{tpu_custom_call.1} parent=1 // pred_check_branch
      %49 = sbr.rel (0) target = $region21
    $region20: #{tpu_custom_call.1} parent=1 // pred_region
      %50 = dma.done [#allocation3], 256
    $region21: #{tpu_custom_call.1} parent=1 // pred_fallthru
      _
    %51 = vsyncpa [#allocation3], 1

</llo_original>
